<compile_context>
chip_gen: v5e
topology: v5e:2x2
jax: 0.10.0
libtpu: 0.0.40
codegen_flags: <defaults>
</compile_context>

<pallas_src>
import functools

import jax
import jax.numpy as jnp
from jax.experimental import pallas as pl
from jax.experimental.pallas import tpu as pltpu


def _mlp_kernel(x_ref, w1_ref, b1_ref, w2_ref, b2_ref, w3_ref, b3_ref, o_ref):
    # Fused three-layer linear chain; intermediates stay in vregs/VMEM.
    h1 = jnp.dot(x_ref[...], w1_ref[...],
                 preferred_element_type=jnp.float32) + b1_ref[...]
    h2 = jnp.dot(h1, w2_ref[...],
                 preferred_element_type=jnp.float32) + b2_ref[...]
    h3 = jnp.dot(h2, w3_ref[...],
                 preferred_element_type=jnp.float32) + b3_ref[...]
    o_ref[...] = h3.astype(o_ref.dtype)


def _round_up(n, m):
    return ((n + m - 1) // m) * m


def _num_tensorcores():
    # v7x has 2 TensorCores per chip; v5e/v6e have 1. Best-effort detection --
    # if it misreports we just lose a sub-microsecond megacore win.
    kind = jax.devices()[0].device_kind.lower()
    return 2 if ("v7" in kind or "7x" in kind) else 1


def _pick_batch_tiling(batch, n_tc):
    # <=256-row tiles bound the f32 h2 intermediate (block_b x 256) so the
    # accumulators don't overrun the vreg file; the step count stays a multiple
    # of the TensorCore count, and small batches get one step per core (grid
    # step overhead dominates compute at these shapes).
    b8 = _round_up(batch, 8)
    steps = max(n_tc, pl.cdiv(b8, 256))
    steps = _round_up(steps, n_tc)
    block_b = _round_up(pl.cdiv(b8, steps), 8)
    return block_b, block_b * steps, steps


@functools.partial(jax.jit, static_argnames=("n_tc",))
def mlp_forward(x, w1, b1, w2, b2, w3, b3, *, n_tc=1):
    """x: (B, D_in) f32. Weights: (in, out). Biases: (1, out). Prep is done once
    at init, so the per-call path is only the fused pallas_call."""
    B, D_in = x.shape
    H1 = w1.shape[1]
    H2 = w2.shape[1]
    C = w3.shape[1]

    block_b, B_pad, steps = _pick_batch_tiling(B, n_tc)
    if B_pad != B:  # statically elided when B is already a tile multiple
        x = jnp.pad(x, ((0, B_pad - B), (0, 0)))

    # VMEM: all weights resident (~320 KiB f32) + per-step x/out tiles (<50 KiB)
    # -- far below every generation's scoped-VMEM default, so no reduction grid
    # axis and no vmem_limit override needed at these shapes.
    out = pl.pallas_call(
        _mlp_kernel,
        out_shape=jax.ShapeDtypeStruct((B_pad, C), x.dtype),
        grid_spec=pltpu.PrefetchScalarGridSpec(
            num_scalar_prefetch=0,
            grid=(steps,),
            in_specs=[
                pl.BlockSpec((block_b, D_in), lambda i: (i, 0)),  # x tile
                pl.BlockSpec((D_in, H1), lambda i: (0, 0)),       # w1 (resident)
                pl.BlockSpec((1, H1), lambda i: (0, 0)),          # b1
                pl.BlockSpec((H1, H2), lambda i: (0, 0)),         # w2 (resident)
                pl.BlockSpec((1, H2), lambda i: (0, 0)),          # b2
                pl.BlockSpec((H2, C), lambda i: (0, 0)),          # w3 (resident)
                pl.BlockSpec((1, C), lambda i: (0, 0)),           # b3
            ],
            out_specs=pl.BlockSpec((block_b, C), lambda i: (i, 0)),
        ),
        compiler_params=pltpu.CompilerParams(
            dimension_semantics=("parallel",)),
    )(x, w1, b1, w2, b2, w3, b3)

    return out if B_pad == B else out[:B]


def init_mlp_params(key, input_dim, num_classes, dtype=jnp.float32):
    """PyTorch nn.Linear-style init, U(-1/sqrt(in), 1/sqrt(in)).

    Weights are produced directly in (in_features, out_features) layout and
    biases as (1, out_features) -- i.e. parameter prep is done ONCE here,
    outside the per-call path (perf review item 1)."""
    k1, k2, k3 = jax.random.split(key, 3)
    dims = [(input_dim, 128), (128, 256), (256, num_classes)]
    params = []
    for k, (fan_in, fan_out) in zip((k1, k2, k3), dims):
        kw, kb = jax.random.split(k)
        bound = 1.0 / (fan_in ** 0.5)
        w = jax.random.uniform(kw, (fan_in, fan_out), dtype, -bound, bound)
        b = jax.random.uniform(kb, (1, fan_out), dtype, -bound, bound)
        params += [w, b]
    return tuple(params)


if __name__ == "__main__":
    input_dim = 32
    num_classes = 16
    batch = 256  # small; multiple of 8 so no batch padding / post-slice needed

    root = jax.random.PRNGKey(0)
    kx, kp = jax.random.split(root)
    x = jax.random.normal(kx, (batch, input_dim), jnp.float32)
    w1, b1, w2, b2, w3, b3 = init_mlp_params(kp, input_dim, num_classes)

    fwd = functools.partial(mlp_forward, n_tc=_num_tensorcores())
    out = jax.block_until_ready(fwd(x, w1, b1, w2, b2, w3, b3))

    # Reference: plain-JAX f32 linear chain (same math as the PyTorch module).
    # Kernel runs fully in f32, so only MXU rounding separates the two paths.
    ref = ((x @ w1 + b1) @ w2 + b2) @ w3 + b3
    assert out.shape == (batch, num_classes)
    assert jnp.allclose(out, ref, atol=2e-2, rtol=2e-2), (
        float(jnp.max(jnp.abs(out - ref))))

    print("KERNEL_OK")
</pallas_src>

<mosaic_0001>
module attributes {stable_mosaic.version = 11 : i64} {
  func.func @_mlp_kernel(%arg0: i32, %arg1: memref<256x32xf32, #tpu.memory_space<vmem>>, %arg2: memref<32x128xf32, #tpu.memory_space<vmem>>, %arg3: memref<1x128xf32, #tpu.memory_space<vmem>>, %arg4: memref<128x256xf32, #tpu.memory_space<vmem>>, %arg5: memref<1x256xf32, #tpu.memory_space<vmem>>, %arg6: memref<256x16xf32, #tpu.memory_space<vmem>>, %arg7: memref<1x16xf32, #tpu.memory_space<vmem>>, %arg8: memref<256x16xf32, #tpu.memory_space<vmem>>) attributes {dimension_semantics = [#tpu.dimension_semantics<parallel>], iteration_bounds = array<i64: 1>, scalar_prefetch = 0 : i64, scratch_operands = 0 : i64, tpu.core_type = #tpu.core_type<tc>, window_params = [{transform_indices = @transform_0, window_bounds = array<i64: 256, 32>}, {pipeline_mode = #tpu.pipeline_mode<synchronous>, transform_indices = @transform_1, window_bounds = array<i64: 32, 128>}, {pipeline_mode = #tpu.pipeline_mode<synchronous>, transform_indices = @transform_2, window_bounds = array<i64: 1, 128>}, {pipeline_mode = #tpu.pipeline_mode<synchronous>, transform_indices = @transform_3, window_bounds = array<i64: 128, 256>}, {pipeline_mode = #tpu.pipeline_mode<synchronous>, transform_indices = @transform_4, window_bounds = array<i64: 1, 256>}, {pipeline_mode = #tpu.pipeline_mode<synchronous>, transform_indices = @transform_5, window_bounds = array<i64: 256, 16>}, {pipeline_mode = #tpu.pipeline_mode<synchronous>, transform_indices = @transform_6, window_bounds = array<i64: 1, 16>}, {transform_indices = @transform_7, window_bounds = array<i64: 256, 16>}]} {
    %c0 = arith.constant 0 : index
    %c0_0 = arith.constant 0 : index
    %0 = vector.load %arg1[%c0, %c0_0] : memref<256x32xf32, #tpu.memory_space<vmem>>, vector<256x32xf32>
    %c0_1 = arith.constant 0 : index
    %c0_2 = arith.constant 0 : index
    %1 = vector.load %arg2[%c0_1, %c0_2] : memref<32x128xf32, #tpu.memory_space<vmem>>, vector<32x128xf32>
    %cst = arith.constant dense<0.000000e+00> : vector<256x128xf32>
    %2 = tpu.matmul %0, %1, %cst {dimension_numbers = #tpu.dot_dimension_numbers<[1], [0], [0], [1], [0, 0, 1, 1], [], []>} : vector<256x32xf32>, vector<32x128xf32>, vector<256x128xf32> -> vector<256x128xf32>
    %c0_3 = arith.constant 0 : index
    %c0_4 = arith.constant 0 : index
    %3 = vector.load %arg3[%c0_3, %c0_4] : memref<1x128xf32, #tpu.memory_space<vmem>>, vector<1x128xf32>
    %4 = vector.broadcast %3 : vector<1x128xf32> to vector<256x128xf32>
    %5 = arith.addf %2, %4 : vector<256x128xf32>
    %c0_5 = arith.constant 0 : index
    %c0_6 = arith.constant 0 : index
    %6 = vector.load %arg4[%c0_5, %c0_6] : memref<128x256xf32, #tpu.memory_space<vmem>>, vector<128x256xf32>
    %cst_7 = arith.constant dense<0.000000e+00> : vector<256x256xf32>
    %7 = tpu.matmul %5, %6, %cst_7 {dimension_numbers = #tpu.dot_dimension_numbers<[1], [0], [0], [1], [0, 0, 1, 1], [], []>} : vector<256x128xf32>, vector<128x256xf32>, vector<256x256xf32> -> vector<256x256xf32>
    %c0_8 = arith.constant 0 : index
    %c0_9 = arith.constant 0 : index
    %8 = vector.load %arg5[%c0_8, %c0_9] : memref<1x256xf32, #tpu.memory_space<vmem>>, vector<1x256xf32>
    %9 = vector.broadcast %8 : vector<1x256xf32> to vector<256x256xf32>
    %10 = arith.addf %7, %9 : vector<256x256xf32>
    %c0_10 = arith.constant 0 : index
    %c0_11 = arith.constant 0 : index
    %11 = vector.load %arg6[%c0_10, %c0_11] : memref<256x16xf32, #tpu.memory_space<vmem>>, vector<256x16xf32>
    %cst_12 = arith.constant dense<0.000000e+00> : vector<256x16xf32>
    %12 = tpu.matmul %10, %11, %cst_12 {dimension_numbers = #tpu.dot_dimension_numbers<[1], [0], [0], [1], [0, 0, 1, 1], [], []>} : vector<256x256xf32>, vector<256x16xf32>, vector<256x16xf32> -> vector<256x16xf32>
    %c0_13 = arith.constant 0 : index
    %c0_14 = arith.constant 0 : index
    %13 = vector.load %arg7[%c0_13, %c0_14] : memref<1x16xf32, #tpu.memory_space<vmem>>, vector<1x16xf32>
    %14 = vector.broadcast %13 : vector<1x16xf32> to vector<256x16xf32>
    %15 = arith.addf %12, %14 : vector<256x16xf32>
    %c0_15 = arith.constant 0 : index
    %c0_16 = arith.constant 0 : index
    %16 = vector.load %arg8[%c0_15, %c0_16] : memref<256x16xf32, #tpu.memory_space<vmem>>, vector<256x16xf32>
    tpu.vector_store %arg8[%c0_15, %c0_16], %15 {strides = array<i32>} : memref<256x16xf32, #tpu.memory_space<vmem>>, vector<256x16xf32>,
    return
  }
  func.func @transform_0(%arg0: i32) -> (i32, i32) {
    %c0_i32 = arith.constant 0 : i32
    %c0_i32_0 = arith.constant 0 : i32
    return %arg0, %c0_i32 : i32, i32
  }
  func.func @transform_1(%arg0: i32) -> (i32, i32) {
    %c0_i32 = arith.constant 0 : i32
    %c0_i32_0 = arith.constant 0 : i32
    %c0_i32_1 = arith.constant 0 : i32
    return %c0_i32, %c0_i32_0 : i32, i32
  }
  func.func @transform_2(%arg0: i32) -> (i32, i32) {
    %c0_i32 = arith.constant 0 : i32
    %c0_i32_0 = arith.constant 0 : i32
    %c0_i32_1 = arith.constant 0 : i32
    return %c0_i32, %c0_i32_0 : i32, i32
  }
  func.func @transform_3(%arg0: i32) -> (i32, i32) {
    %c0_i32 = arith.constant 0 : i32
    %c0_i32_0 = arith.constant 0 : i32
    %c0_i32_1 = arith.constant 0 : i32
    return %c0_i32, %c0_i32_0 : i32, i32
  }
  func.func @transform_4(%arg0: i32) -> (i32, i32) {
    %c0_i32 = arith.constant 0 : i32
    %c0_i32_0 = arith.constant 0 : i32
    %c0_i32_1 = arith.constant 0 : i32
    return %c0_i32, %c0_i32_0 : i32, i32
  }
  func.func @transform_5(%arg0: i32) -> (i32, i32) {
    %c0_i32 = arith.constant 0 : i32
    %c0_i32_0 = arith.constant 0 : i32
    %c0_i32_1 = arith.constant 0 : i32
    return %c0_i32, %c0_i32_0 : i32, i32
  }
  func.func @transform_6(%arg0: i32) -> (i32, i32) {
    %c0_i32 = arith.constant 0 : i32
    %c0_i32_0 = arith.constant 0 : i32
    %c0_i32_1 = arith.constant 0 : i32
    return %c0_i32, %c0_i32_0 : i32, i32
  }
  func.func @transform_7(%arg0: i32) -> (i32, i32) {
    %c0_i32 = arith.constant 0 : i32
    %c0_i32_0 = arith.constant 0 : i32
    return %arg0, %c0_i32 : i32, i32
  }
}

</mosaic_0001>

<llo_original>
// kernel: mlp_forward.1
$region0: #{mlp_forward.1}
  #allocation0 [shape = 'u32[]', space=smem, size = 0x4, offset = 0x4, fixed_abs, tag = 'smem constant byte address 0x4 - core index']
  #allocation1 [shape = 'u32[72,128]{1,0:T(1,128)}', space=vmem, size = 0x9000, scoped, tag = 'internal scratch']
  %s0 = inlined_call_operand.vmem [shape: f32[256,32], index: 0, kind: input, shape index: {}]
  %s1 = inlined_call_operand.vmem [shape: f32[32,128], index: 1, kind: input, shape index: {}]
  %s2 = inlined_call_operand.vmem [shape: f32[1,128], index: 2, kind: input, shape index: {}]
  %s3 = inlined_call_operand.vmem [shape: f32[128,256], index: 3, kind: input, shape index: {}]
  %s4 = inlined_call_operand.vmem [shape: f32[1,256], index: 4, kind: input, shape index: {}]
  %s5 = inlined_call_operand.vmem [shape: f32[256,16], index: 5, kind: input, shape index: {}]
  %s6 = inlined_call_operand.vmem [shape: f32[1,16], index: 6, kind: input, shape index: {}]
  %s7 = inlined_call_operand.vmem [shape: f32[256,16], index: 7, kind: output, shape index: {}]
  %s8 = sld [smem:[#allocation0]]
  $region38: #{mlp_forward.1} parent=0
    _
  %s10 = ssub.s32 1, %s8
  %s11 = scalar_select 0, %s10, %s8
  // Predicated region
  $region2: #{mlp_forward.1} parent=0 // pred_check
    _
  $region3: #{mlp_forward.1} parent=0 // pred_check_branch
    %13 = sbr.rel (0) target = $region5
  $region4: #{mlp_forward.1} parent=0 // pred_region
    _
  $region5: #{mlp_forward.1} parent=0 // pred_fallthru
    _
  // Predicated region
  $region6: #{mlp_forward.1} parent=0 // pred_check
    _
  $region7: #{mlp_forward.1} parent=0 // pred_check_branch
    %15 = sbr.rel (0) target = $region9
  $region8: #{mlp_forward.1} parent=0 // pred_region
    _
  $region9: #{mlp_forward.1} parent=0 // pred_fallthru
    _
  // Predicated region
  $region10: #{mlp_forward.1} parent=0 // pred_check
    _
  $region11: #{mlp_forward.1} parent=0 // pred_check_branch
    %17 = sbr.rel (0) target = $region13
  $region12: #{mlp_forward.1} parent=0 // pred_region
    _
  $region13: #{mlp_forward.1} parent=0 // pred_fallthru
    _
  // Predicated region
  $region14: #{mlp_forward.1} parent=0 // pred_check
    _
  $region15: #{mlp_forward.1} parent=0 // pred_check_branch
    %19 = sbr.rel (0) target = $region17
  $region16: #{mlp_forward.1} parent=0 // pred_region
    _
  $region17: #{mlp_forward.1} parent=0 // pred_fallthru
    _
  // Predicated region
  $region18: #{mlp_forward.1} parent=0 // pred_check
    _
  $region19: #{mlp_forward.1} parent=0 // pred_check_branch
    %21 = sbr.rel (0) target = $region21
  $region20: #{mlp_forward.1} parent=0 // pred_region
    _
  $region21: #{mlp_forward.1} parent=0 // pred_fallthru
    _
  // Predicated region
  $region22: #{mlp_forward.1} parent=0 // pred_check
    _
  $region23: #{mlp_forward.1} parent=0 // pred_check_branch
    %23 = sbr.rel (0) target = $region25
  $region24: #{mlp_forward.1} parent=0 // pred_region
    _
  $region25: #{mlp_forward.1} parent=0 // pred_fallthru
    _
  // Predicated region
  $region26: #{mlp_forward.1} parent=0 // pred_check
    _
  $region27: #{mlp_forward.1} parent=0 // pred_check_branch
    %25 = sbr.rel (0) target = $region29
  $region28: #{mlp_forward.1} parent=0 // pred_region
    _
  $region29: #{mlp_forward.1} parent=0 // pred_fallthru
    _
  %v26 = vld [vmem:[%s0] sm:$0xff]
  %v27 = vld [vmem:[%s0 + $0x8] sm:$0xff]
  %v28 = vld [vmem:[%s0 + $0x10] sm:$0xff]
  %v29 = vld [vmem:[%s0 + $0x18] sm:$0xff]
  %v30 = vld [vmem:[%s0 + $0x20] sm:$0xff]
  %v31 = vld [vmem:[%s0 + $0x28] sm:$0xff]
  %v32 = vld [vmem:[%s0 + $0x30] sm:$0xff]
  %v33 = vld [vmem:[%s0 + $0x38] sm:$0xff]
  %v34 = vld [vmem:[%s0 + $0x40] sm:$0xff]
  %v35 = vld [vmem:[%s0 + $0x48] sm:$0xff]
  %v36 = vld [vmem:[%s0 + $0x50] sm:$0xff]
  %v37 = vld [vmem:[%s0 + $0x58] sm:$0xff]
  %v38 = vld [vmem:[%s0 + $0x60] sm:$0xff]
  %v39 = vld [vmem:[%s0 + $0x68] sm:$0xff]
  %v40 = vld [vmem:[%s0 + $0x70] sm:$0xff]
  %v41 = vld [vmem:[%s0 + $0x78] sm:$0xff]
  %v42 = vld [vmem:[%s0 + $0x80] sm:$0xff]
  %v43 = vld [vmem:[%s0 + $0x88] sm:$0xff]
  %v44 = vld [vmem:[%s0 + $0x90] sm:$0xff]
  %v45 = vld [vmem:[%s0 + $0x98] sm:$0xff]
  %v46 = vld [vmem:[%s0 + $0xa0] sm:$0xff]
  %v47 = vld [vmem:[%s0 + $0xa8] sm:$0xff]
  %v48 = vld [vmem:[%s0 + $0xb0] sm:$0xff]
  %v49 = vld [vmem:[%s0 + $0xb8] sm:$0xff]
  %v50 = vld [vmem:[%s0 + $0xc0] sm:$0xff]
  %v51 = vld [vmem:[%s0 + $0xc8] sm:$0xff]
  %v52 = vld [vmem:[%s0 + $0xd0] sm:$0xff]
  %v53 = vld [vmem:[%s0 + $0xd8] sm:$0xff]
  %v54 = vld [vmem:[%s0 + $0xe0] sm:$0xff]
  %v55 = vld [vmem:[%s0 + $0xe8] sm:$0xff]
  %v56 = vld [vmem:[%s0 + $0xf0] sm:$0xff]
  %v57 = vld [vmem:[%s0 + $0xf8] sm:$0xff]
  %v58 = vld [vmem:[%s1] sm:$0xff]
  %v59 = vld [vmem:[%s1 + $0x8] sm:$0xff]
  %v60 = vld [vmem:[%s1 + $0x10] sm:$0xff]
  %v61 = vld [vmem:[%s1 + $0x18] sm:$0xff]
  %v62 = vld [vmem:[%s2] sm:$0x1]
  %v64 = vperm.slane %v62, 0
  %vm66 = vcmask 261120
  %v68 = vsel %vm66, %v26, 0
  %v71 = vsel %vm66, %v27, 0
  %v74 = vsel %vm66, %v28, 0
  %v77 = vsel %vm66, %v29, 0
  %v80 = vsel %vm66, %v30, 0
  %v83 = vsel %vm66, %v31, 0
  %v86 = vsel %vm66, %v32, 0
  %v89 = vsel %vm66, %v33, 0
  %v92 = vsel %vm66, %v34, 0
  %v95 = vsel %vm66, %v35, 0
  %v98 = vsel %vm66, %v36, 0
  %v101 = vsel %vm66, %v37, 0
  %v104 = vsel %vm66, %v38, 0
  %v107 = vsel %vm66, %v39, 0
  %v110 = vsel %vm66, %v40, 0
  %v113 = vsel %vm66, %v41, 0
  %v116 = vsel %vm66, %v42, 0
  %v119 = vsel %vm66, %v43, 0
  %v122 = vsel %vm66, %v44, 0
  %v125 = vsel %vm66, %v45, 0
  %v128 = vsel %vm66, %v46, 0
  %v131 = vsel %vm66, %v47, 0
  %v134 = vsel %vm66, %v48, 0
  %v137 = vsel %vm66, %v49, 0
  %v140 = vsel %vm66, %v50, 0
  %v143 = vsel %vm66, %v51, 0
  %v146 = vsel %vm66, %v52, 0
  %v149 = vsel %vm66, %v53, 0
  %v152 = vsel %vm66, %v54, 0
  %v155 = vsel %vm66, %v55, 0
  %v158 = vsel %vm66, %v56, 0
  %v161 = vsel %vm66, %v57, 0
  %163 = vmatpush.msra.mxu0 0.0
  %164 = vmatpush.msra.mxu0 0.0
  %165 = vmatpush.msra.mxu0 0.0
  %166 = vmatpush.msra.mxu0 0.0
  %167 = vmatpush.msra.mxu0 0.0
  %168 = vmatpush.msra.mxu0 0.0
  %169 = vmatpush.msra.mxu0 0.0
  %170 = vmatpush.msra.mxu0 0.0
  %171 = vmatpush.msra.mxu0 0.0
  %172 = vmatpush.msra.mxu0 0.0
  %173 = vmatpush.msra.mxu0 0.0
  %174 = vmatpush.msra.mxu0 0.0
  %175 = vmatpush.msra.mxu0 %v61
  %176 = vmatpush.msra.mxu0 %v60
  %177 = vmatpush.msra.mxu0 %v59
  %178 = vmatpush.msra.mxu0 %v58
  %179 = vmatmul.f32.gmra.mxu0 %v68
  %v180 = vpop.f32.mrf.mxu0
  %v181 = vadd.f32 %v64, %v180
  %182 = vmatmul.f32.gmra.mxu0 %v71
  %v183 = vpop.f32.mrf.mxu0
  %v184 = vadd.f32 %v64, %v183
  %185 = vmatmul.f32.gmra.mxu0 %v74
  %v186 = vpop.f32.mrf.mxu0
  %v187 = vadd.f32 %v64, %v186
  %188 = vmatmul.f32.gmra.mxu0 %v77
  %v189 = vpop.f32.mrf.mxu0
  %v190 = vadd.f32 %v64, %v189
  %191 = vmatmul.f32.gmra.mxu0 %v80
  %v192 = vpop.f32.mrf.mxu0
  %v193 = vadd.f32 %v64, %v192
  %194 = vmatmul.f32.gmra.mxu0 %v83
  %v195 = vpop.f32.mrf.mxu0
  %v196 = vadd.f32 %v64, %v195
  %197 = vmatmul.f32.gmra.mxu0 %v86
  %v198 = vpop.f32.mrf.mxu0
  %v199 = vadd.f32 %v64, %v198
  %200 = vmatmul.f32.gmra.mxu0 %v89
  %v201 = vpop.f32.mrf.mxu0
  %v202 = vadd.f32 %v64, %v201
  %203 = vmatmul.f32.gmra.mxu0 %v92
  %v204 = vpop.f32.mrf.mxu0
  %v205 = vadd.f32 %v64, %v204
  %206 = vmatmul.f32.gmra.mxu0 %v95
  %v207 = vpop.f32.mrf.mxu0
  %v208 = vadd.f32 %v64, %v207
  %209 = vmatmul.f32.gmra.mxu0 %v98
  %v210 = vpop.f32.mrf.mxu0
  %v211 = vadd.f32 %v64, %v210
  %212 = vmatmul.f32.gmra.mxu0 %v101
  %v213 = vpop.f32.mrf.mxu0
  %v214 = vadd.f32 %v64, %v213
  %215 = vmatmul.f32.gmra.mxu0 %v104
  %v216 = vpop.f32.mrf.mxu0
  %v217 = vadd.f32 %v64, %v216
  %218 = vmatmul.f32.gmra.mxu0 %v107
  %v219 = vpop.f32.mrf.mxu0
  %v220 = vadd.f32 %v64, %v219
  %221 = vmatmul.f32.gmra.mxu0 %v110
  %v222 = vpop.f32.mrf.mxu0
  %v223 = vadd.f32 %v64, %v222
  %224 = vmatmul.f32.gmra.mxu0 %v113
  %v225 = vpop.f32.mrf.mxu0
  %v226 = vadd.f32 %v64, %v225
  %227 = vmatmul.f32.gmra.mxu0 %v116
  %v228 = vpop.f32.mrf.mxu0
  %v229 = vadd.f32 %v64, %v228
  %230 = vmatmul.f32.gmra.mxu0 %v119
  %v231 = vpop.f32.mrf.mxu0
  %v232 = vadd.f32 %v64, %v231
  %233 = vmatmul.f32.gmra.mxu0 %v122
  %v234 = vpop.f32.mrf.mxu0
  %v235 = vadd.f32 %v64, %v234
  %236 = vmatmul.f32.gmra.mxu0 %v125
  %v237 = vpop.f32.mrf.mxu0
  %v238 = vadd.f32 %v64, %v237
  %239 = vmatmul.f32.gmra.mxu0 %v128
  %v240 = vpop.f32.mrf.mxu0
  %v241 = vadd.f32 %v64, %v240
  %242 = vmatmul.f32.gmra.mxu0 %v131
  %v243 = vpop.f32.mrf.mxu0
  %v244 = vadd.f32 %v64, %v243
  %245 = vmatmul.f32.gmra.mxu0 %v134
  %v246 = vpop.f32.mrf.mxu0
  %v247 = vadd.f32 %v64, %v246
  %248 = vmatmul.f32.gmra.mxu0 %v137
  %v249 = vpop.f32.mrf.mxu0
  %v250 = vadd.f32 %v64, %v249
  %251 = vmatmul.f32.gmra.mxu0 %v140
  %v252 = vpop.f32.mrf.mxu0
  %v253 = vadd.f32 %v64, %v252
  %254 = vmatmul.f32.gmra.mxu0 %v143
  %v255 = vpop.f32.mrf.mxu0
  %v256 = vadd.f32 %v64, %v255
  %257 = vmatmul.f32.gmra.mxu0 %v146
  %v258 = vpop.f32.mrf.mxu0
  %v259 = vadd.f32 %v64, %v258
  %260 = vmatmul.f32.gmra.mxu0 %v149
  %v261 = vpop.f32.mrf.mxu0
  %v262 = vadd.f32 %v64, %v261
  %263 = vmatmul.f32.gmra.mxu0 %v152
  %v264 = vpop.f32.mrf.mxu0
  %v265 = vadd.f32 %v64, %v264
  %266 = vmatmul.f32.gmra.mxu0 %v155
  %v267 = vpop.f32.mrf.mxu0
  %v268 = vadd.f32 %v64, %v267
  %269 = vmatmul.f32.gmra.mxu0 %v158
  %v270 = vpop.f32.mrf.mxu0
  %v271 = vadd.f32 %v64, %v270
  %272 = vmatmul.f32.gmra.mxu0 %v161
  %v273 = vpop.f32.mrf.mxu0
  %v274 = vadd.f32 %v64, %v273
  %275 = vdwg.mxu0
  %v276 = vld [vmem:[%s3] sm:$0xff]
  %v277 = vld [vmem:[%s3 + $0x8] sm:$0xff]
  %v278 = vld [vmem:[%s3 + $0x10] sm:$0xff]
  %v279 = vld [vmem:[%s3 + $0x18] sm:$0xff]
  %v280 = vld [vmem:[%s3 + $0x20] sm:$0xff]
  %v281 = vld [vmem:[%s3 + $0x28] sm:$0xff]
  %v282 = vld [vmem:[%s3 + $0x30] sm:$0xff]
  %v283 = vld [vmem:[%s3 + $0x38] sm:$0xff]
  %v284 = vld [vmem:[%s3 + $0x40] sm:$0xff]
  %v285 = vld [vmem:[%s3 + $0x48] sm:$0xff]
  %v286 = vld [vmem:[%s3 + $0x50] sm:$0xff]
  %v287 = vld [vmem:[%s3 + $0x58] sm:$0xff]
  %v288 = vld [vmem:[%s3 + $0x60] sm:$0xff]
  %v289 = vld [vmem:[%s3 + $0x68] sm:$0xff]
  %v290 = vld [vmem:[%s3 + $0x70] sm:$0xff]
  %v291 = vld [vmem:[%s3 + $0x78] sm:$0xff]
  %v292 = vld [vmem:[%s3 + $0x80] sm:$0xff]
  %v293 = vld [vmem:[%s3 + $0x88] sm:$0xff]
  %v294 = vld [vmem:[%s3 + $0x90] sm:$0xff]
  %v295 = vld [vmem:[%s3 + $0x98] sm:$0xff]
  %v296 = vld [vmem:[%s3 + $0xa0] sm:$0xff]
  %v297 = vld [vmem:[%s3 + $0xa8] sm:$0xff]
  %v298 = vld [vmem:[%s3 + $0xb0] sm:$0xff]
  %v299 = vld [vmem:[%s3 + $0xb8] sm:$0xff]
  %v300 = vld [vmem:[%s3 + $0xc0] sm:$0xff]
  %v301 = vld [vmem:[%s3 + $0xc8] sm:$0xff]
  %v302 = vld [vmem:[%s3 + $0xd0] sm:$0xff]
  %v303 = vld [vmem:[%s3 + $0xd8] sm:$0xff]
  %v304 = vld [vmem:[%s3 + $0xe0] sm:$0xff]
  %v305 = vld [vmem:[%s3 + $0xe8] sm:$0xff]
  %v306 = vld [vmem:[%s3 + $0xf0] sm:$0xff]
  %v307 = vld [vmem:[%s3 + $0xf8] sm:$0xff]
  %v308 = vld [vmem:[%s4] sm:$0x3]
  %v310 = vperm.slane %v308, 0
  %v311 = vperm.slane %v308, 1
  %314 = vmatpush.msra.mxu0 %v306
  %315 = vmatpush.msra.mxu0 %v304
  %316 = vmatpush.msra.mxu0 %v302
  %317 = vmatpush.msra.mxu0 %v300
  %318 = vmatpush.msra.mxu0 %v298
  %319 = vmatpush.msra.mxu0 %v296
  %320 = vmatpush.msra.mxu0 %v294
  %321 = vmatpush.msra.mxu0 %v292
  %322 = vmatpush.msra.mxu0 %v290
  %323 = vmatpush.msra.mxu0 %v288
  %324 = vmatpush.msra.mxu0 %v286
  %325 = vmatpush.msra.mxu0 %v284
  %326 = vmatpush.msra.mxu0 %v282
  %327 = vmatpush.msra.mxu0 %v280
  %328 = vmatpush.msra.mxu0 %v278
  %329 = vmatpush.msra.mxu0 %v276
  %330 = vmatmul.f32.gmra.mxu0 %v181
  %v331 = vpop.f32.mrf.mxu0
  %v332 = vadd.f32 %v310, %v331
  %333 = vmatmul.f32.gmra.mxu0 %v184
  %v334 = vpop.f32.mrf.mxu0
  %v335 = vadd.f32 %v310, %v334
  %336 = vmatmul.f32.gmra.mxu0 %v187
  %v337 = vpop.f32.mrf.mxu0
  %v338 = vadd.f32 %v310, %v337
  %339 = vmatmul.f32.gmra.mxu0 %v190
  %v340 = vpop.f32.mrf.mxu0
  %v341 = vadd.f32 %v310, %v340
  %342 = vmatmul.f32.gmra.mxu0 %v193
  %v343 = vpop.f32.mrf.mxu0
  %v344 = vadd.f32 %v310, %v343
  %345 = vmatmul.f32.gmra.mxu0 %v196
  %v346 = vpop.f32.mrf.mxu0
  %v347 = vadd.f32 %v310, %v346
  %348 = vmatmul.f32.gmra.mxu0 %v199
  %v349 = vpop.f32.mrf.mxu0
  %v350 = vadd.f32 %v310, %v349
  %351 = vmatmul.f32.gmra.mxu0 %v202
  %v352 = vpop.f32.mrf.mxu0
  %v353 = vadd.f32 %v310, %v352
  %354 = vmatmul.f32.gmra.mxu0 %v205
  %v355 = vpop.f32.mrf.mxu0
  %v356 = vadd.f32 %v310, %v355
  %357 = vmatmul.f32.gmra.mxu0 %v208
  %v358 = vpop.f32.mrf.mxu0
  %v359 = vadd.f32 %v310, %v358
  %360 = vmatmul.f32.gmra.mxu0 %v211
  %v361 = vpop.f32.mrf.mxu0
  %v362 = vadd.f32 %v310, %v361
  %363 = vmatmul.f32.gmra.mxu0 %v214
  %v364 = vpop.f32.mrf.mxu0
  %v365 = vadd.f32 %v310, %v364
  %366 = vmatmul.f32.gmra.mxu0 %v217
  %v367 = vpop.f32.mrf.mxu0
  %v368 = vadd.f32 %v310, %v367
  %369 = vmatmul.f32.gmra.mxu0 %v220
  %v370 = vpop.f32.mrf.mxu0
  %v371 = vadd.f32 %v310, %v370
  %372 = vmatmul.f32.gmra.mxu0 %v223
  %v373 = vpop.f32.mrf.mxu0
  %v374 = vadd.f32 %v310, %v373
  %375 = vmatmul.f32.gmra.mxu0 %v226
  %v376 = vpop.f32.mrf.mxu0
  %v377 = vadd.f32 %v310, %v376
  %378 = vmatmul.f32.gmra.mxu0 %v229
  %v379 = vpop.f32.mrf.mxu0
  %v380 = vadd.f32 %v310, %v379
  %381 = vmatmul.f32.gmra.mxu0 %v232
  %v382 = vpop.f32.mrf.mxu0
  %v383 = vadd.f32 %v310, %v382
  %384 = vmatmul.f32.gmra.mxu0 %v235
  %v385 = vpop.f32.mrf.mxu0
  %v386 = vadd.f32 %v310, %v385
  %387 = vmatmul.f32.gmra.mxu0 %v238
  %v388 = vpop.f32.mrf.mxu0
  %v389 = vadd.f32 %v310, %v388
  %390 = vmatmul.f32.gmra.mxu0 %v241
  %v391 = vpop.f32.mrf.mxu0
  %v392 = vadd.f32 %v310, %v391
  %393 = vmatmul.f32.gmra.mxu0 %v244
  %v394 = vpop.f32.mrf.mxu0
  %v395 = vadd.f32 %v310, %v394
  %396 = vmatmul.f32.gmra.mxu0 %v247
  %v397 = vpop.f32.mrf.mxu0
  %v398 = vadd.f32 %v310, %v397
  %399 = vmatmul.f32.gmra.mxu0 %v250
  %v400 = vpop.f32.mrf.mxu0
  %v401 = vadd.f32 %v310, %v400
  %402 = vmatmul.f32.gmra.mxu0 %v253
  %v403 = vpop.f32.mrf.mxu0
  %v404 = vadd.f32 %v310, %v403
  %405 = vmatmul.f32.gmra.mxu0 %v256
  %v406 = vpop.f32.mrf.mxu0
  %v407 = vadd.f32 %v310, %v406
  %408 = vmatmul.f32.gmra.mxu0 %v259
  %v409 = vpop.f32.mrf.mxu0
  %v410 = vadd.f32 %v310, %v409
  %411 = vmatmul.f32.gmra.mxu0 %v262
  %v412 = vpop.f32.mrf.mxu0
  %v413 = vadd.f32 %v310, %v412
  %414 = vmatmul.f32.gmra.mxu0 %v265
  %v415 = vpop.f32.mrf.mxu0
  %v416 = vadd.f32 %v310, %v415
  %417 = vmatmul.f32.gmra.mxu0 %v268
  %v418 = vpop.f32.mrf.mxu0
  %v419 = vadd.f32 %v310, %v418
  %420 = vmatmul.f32.gmra.mxu0 %v271
  %v421 = vpop.f32.mrf.mxu0
  %v422 = vadd.f32 %v310, %v421
  %423 = vmatmul.f32.gmra.mxu0 %v274
  %v424 = vpop.f32.mrf.mxu0
  %v425 = vadd.f32 %v310, %v424
  %426 = vdwg.mxu0
  %427 = vmatpush.msra.mxu0 %v307
  %428 = vmatpush.msra.mxu0 %v305
  %429 = vmatpush.msra.mxu0 %v303
  %430 = vmatpush.msra.mxu0 %v301
  %431 = vmatpush.msra.mxu0 %v299
  %432 = vmatpush.msra.mxu0 %v297
  %433 = vmatpush.msra.mxu0 %v295
  %434 = vmatpush.msra.mxu0 %v293
  %435 = vmatpush.msra.mxu0 %v291
  %436 = vmatpush.msra.mxu0 %v289
  %437 = vmatpush.msra.mxu0 %v287
  %438 = vmatpush.msra.mxu0 %v285
  %439 = vmatpush.msra.mxu0 %v283
  %440 = vmatpush.msra.mxu0 %v281
  %441 = vmatpush.msra.mxu0 %v279
  %442 = vmatpush.msra.mxu0 %v277
  %443 = vmatmul.f32.gmra.mxu0 %v181
  %v444 = vpop.f32.mrf.mxu0
  %v445 = vadd.f32 %v311, %v444
  %446 = vmatmul.f32.gmra.mxu0 %v184
  %v447 = vpop.f32.mrf.mxu0
  %v448 = vadd.f32 %v311, %v447
  %449 = vmatmul.f32.gmra.mxu0 %v187
  %v450 = vpop.f32.mrf.mxu0
  %v451 = vadd.f32 %v311, %v450
  %452 = vmatmul.f32.gmra.mxu0 %v190
  %v453 = vpop.f32.mrf.mxu0
  %v454 = vadd.f32 %v311, %v453
  %455 = vmatmul.f32.gmra.mxu0 %v193
  %v456 = vpop.f32.mrf.mxu0
  %v457 = vadd.f32 %v311, %v456
  %458 = vmatmul.f32.gmra.mxu0 %v196
  %v459 = vpop.f32.mrf.mxu0
  %v460 = vadd.f32 %v311, %v459
  %461 = vmatmul.f32.gmra.mxu0 %v199
  %v462 = vpop.f32.mrf.mxu0
  %v463 = vadd.f32 %v311, %v462
  %464 = vmatmul.f32.gmra.mxu0 %v202
  %v465 = vpop.f32.mrf.mxu0
  %v466 = vadd.f32 %v311, %v465
  %467 = vmatmul.f32.gmra.mxu0 %v205
  %v468 = vpop.f32.mrf.mxu0
  %v469 = vadd.f32 %v311, %v468
  %470 = vmatmul.f32.gmra.mxu0 %v208
  %v471 = vpop.f32.mrf.mxu0
  %v472 = vadd.f32 %v311, %v471
  %473 = vmatmul.f32.gmra.mxu0 %v211
  %v474 = vpop.f32.mrf.mxu0
  %v475 = vadd.f32 %v311, %v474
  %476 = vmatmul.f32.gmra.mxu0 %v214
  %v477 = vpop.f32.mrf.mxu0
  %v478 = vadd.f32 %v311, %v477
  %479 = vmatmul.f32.gmra.mxu0 %v217
  %v480 = vpop.f32.mrf.mxu0
  %v481 = vadd.f32 %v311, %v480
  %482 = vmatmul.f32.gmra.mxu0 %v220
  %v483 = vpop.f32.mrf.mxu0
  %v484 = vadd.f32 %v311, %v483
  %485 = vmatmul.f32.gmra.mxu0 %v223
  %v486 = vpop.f32.mrf.mxu0
  %v487 = vadd.f32 %v311, %v486
  %488 = vmatmul.f32.gmra.mxu0 %v226
  %v489 = vpop.f32.mrf.mxu0
  %v490 = vadd.f32 %v311, %v489
  %491 = vmatmul.f32.gmra.mxu0 %v229
  %v492 = vpop.f32.mrf.mxu0
  %v493 = vadd.f32 %v311, %v492
  %494 = vmatmul.f32.gmra.mxu0 %v232
  %v495 = vpop.f32.mrf.mxu0
  %v496 = vadd.f32 %v311, %v495
  %497 = vmatmul.f32.gmra.mxu0 %v235
  %v498 = vpop.f32.mrf.mxu0
  %v499 = vadd.f32 %v311, %v498
  %500 = vmatmul.f32.gmra.mxu0 %v238
  %v501 = vpop.f32.mrf.mxu0
  %v502 = vadd.f32 %v311, %v501
  %503 = vmatmul.f32.gmra.mxu0 %v241
  %v504 = vpop.f32.mrf.mxu0
  %v505 = vadd.f32 %v311, %v504
  %506 = vmatmul.f32.gmra.mxu0 %v244
  %v507 = vpop.f32.mrf.mxu0
  %v508 = vadd.f32 %v311, %v507
  %509 = vmatmul.f32.gmra.mxu0 %v247
  %v510 = vpop.f32.mrf.mxu0
  %v511 = vadd.f32 %v311, %v510
  %512 = vmatmul.f32.gmra.mxu0 %v250
  %v513 = vpop.f32.mrf.mxu0
  %v514 = vadd.f32 %v311, %v513
  %515 = vmatmul.f32.gmra.mxu0 %v253
  %v516 = vpop.f32.mrf.mxu0
  %v517 = vadd.f32 %v311, %v516
  %518 = vmatmul.f32.gmra.mxu0 %v256
  %v519 = vpop.f32.mrf.mxu0
  %v520 = vadd.f32 %v311, %v519
  %521 = vmatmul.f32.gmra.mxu0 %v259
  %v522 = vpop.f32.mrf.mxu0
  %v523 = vadd.f32 %v311, %v522
  %524 = vmatmul.f32.gmra.mxu0 %v262
  %v525 = vpop.f32.mrf.mxu0
  %v526 = vadd.f32 %v311, %v525
  %527 = vmatmul.f32.gmra.mxu0 %v265
  %v528 = vpop.f32.mrf.mxu0
  %v529 = vadd.f32 %v311, %v528
  %530 = vmatmul.f32.gmra.mxu0 %v268
  %v531 = vpop.f32.mrf.mxu0
  %v532 = vadd.f32 %v311, %v531
  %533 = vmatmul.f32.gmra.mxu0 %v271
  %v534 = vpop.f32.mrf.mxu0
  %v535 = vadd.f32 %v311, %v534
  %536 = vmatmul.f32.gmra.mxu0 %v274
  %v537 = vpop.f32.mrf.mxu0
  %v538 = vadd.f32 %v311, %v537
  %539 = vdwg.mxu0
  %v540 = vld [vmem:[%s5] sm:$0xff]
  %v541 = vld [vmem:[%s5 + $0x8] sm:$0xff]
  %v542 = vld [vmem:[%s5 + $0x10] sm:$0xff]
  %v543 = vld [vmem:[%s5 + $0x18] sm:$0xff]
  %v544 = vld [vmem:[%s5 + $0x20] sm:$0xff]
  %v545 = vld [vmem:[%s5 + $0x28] sm:$0xff]
  %v546 = vld [vmem:[%s5 + $0x30] sm:$0xff]
  %v547 = vld [vmem:[%s5 + $0x38] sm:$0xff]
  %v548 = vld [vmem:[%s5 + $0x40] sm:$0xff]
  %v549 = vld [vmem:[%s5 + $0x48] sm:$0xff]
  %v550 = vld [vmem:[%s5 + $0x50] sm:$0xff]
  %v551 = vld [vmem:[%s5 + $0x58] sm:$0xff]
  %v552 = vld [vmem:[%s5 + $0x60] sm:$0xff]
  %v553 = vld [vmem:[%s5 + $0x68] sm:$0xff]
  %v554 = vld [vmem:[%s5 + $0x70] sm:$0xff]
  %v555 = vld [vmem:[%s5 + $0x78] sm:$0xff]
  %v556 = vld [vmem:[%s5 + $0x80] sm:$0xff]
  %v557 = vld [vmem:[%s5 + $0x88] sm:$0xff]
  %v558 = vld [vmem:[%s5 + $0x90] sm:$0xff]
  %v559 = vld [vmem:[%s5 + $0x98] sm:$0xff]
  %v560 = vld [vmem:[%s5 + $0xa0] sm:$0xff]
  %v561 = vld [vmem:[%s5 + $0xa8] sm:$0xff]
  %v562 = vld [vmem:[%s5 + $0xb0] sm:$0xff]
  %v563 = vld [vmem:[%s5 + $0xb8] sm:$0xff]
  %v564 = vld [vmem:[%s5 + $0xc0] sm:$0xff]
  %v565 = vld [vmem:[%s5 + $0xc8] sm:$0xff]
  %v566 = vld [vmem:[%s5 + $0xd0] sm:$0xff]
  %v567 = vld [vmem:[%s5 + $0xd8] sm:$0xff]
  %v568 = vld [vmem:[%s5 + $0xe0] sm:$0xff]
  %v569 = vld [vmem:[%s5 + $0xe8] sm:$0xff]
  %v570 = vld [vmem:[%s5 + $0xf0] sm:$0xff]
  %v571 = vld [vmem:[%s5 + $0xf8] sm:$0xff]
  %v572 = vld [vmem:[%s6] sm:$0x1]
  %v574 = vperm.slane %v572, 0
  %576 = vmatpush.msra.mxu0 %v555
  %577 = vmatpush.msra.mxu0 %v554
  %578 = vmatpush.msra.mxu0 %v553
  %579 = vmatpush.msra.mxu0 %v552
  %580 = vmatpush.msra.mxu0 %v551
  %581 = vmatpush.msra.mxu0 %v550
  %582 = vmatpush.msra.mxu0 %v549
  %583 = vmatpush.msra.mxu0 %v548
  %584 = vmatpush.msra.mxu0 %v547
  %585 = vmatpush.msra.mxu0 %v546
  %586 = vmatpush.msra.mxu0 %v545
  %587 = vmatpush.msra.mxu0 %v544
  %588 = vmatpush.msra.mxu0 %v543
  %589 = vmatpush.msra.mxu0 %v542
  %590 = vmatpush.msra.mxu0 %v541
  %591 = vmatpush.msra.mxu0 %v540
  %592 = vmatmul.f32.gmra.mxu0 %v332
  %v593 = vpop.f32.mrf.mxu0
  %v594 = vadd.f32 %v574, %v593
  %595 = vmatmul.f32.gmra.mxu0 %v335
  %v596 = vpop.f32.mrf.mxu0
  %v597 = vadd.f32 %v574, %v596
  %598 = vmatmul.f32.gmra.mxu0 %v338
  %v599 = vpop.f32.mrf.mxu0
  %v600 = vadd.f32 %v574, %v599
  %601 = vmatmul.f32.gmra.mxu0 %v341
  %v602 = vpop.f32.mrf.mxu0
  %v603 = vadd.f32 %v574, %v602
  %604 = vmatmul.f32.gmra.mxu0 %v344
  %v605 = vpop.f32.mrf.mxu0
  %v606 = vadd.f32 %v574, %v605
  %607 = vmatmul.f32.gmra.mxu0 %v347
  %v608 = vpop.f32.mrf.mxu0
  %v609 = vadd.f32 %v574, %v608
  %610 = vmatmul.f32.gmra.mxu0 %v350
  %v611 = vpop.f32.mrf.mxu0
  %v612 = vadd.f32 %v574, %v611
  %613 = vmatmul.f32.gmra.mxu0 %v353
  %v614 = vpop.f32.mrf.mxu0
  %v615 = vadd.f32 %v574, %v614
  %616 = vmatmul.f32.gmra.mxu0 %v356
  %v617 = vpop.f32.mrf.mxu0
  %v618 = vadd.f32 %v574, %v617
  %619 = vmatmul.f32.gmra.mxu0 %v359
  %v620 = vpop.f32.mrf.mxu0
  %v621 = vadd.f32 %v574, %v620
  %622 = vmatmul.f32.gmra.mxu0 %v362
  %v623 = vpop.f32.mrf.mxu0
  %v624 = vadd.f32 %v574, %v623
  %625 = vmatmul.f32.gmra.mxu0 %v365
  %v626 = vpop.f32.mrf.mxu0
  %v627 = vadd.f32 %v574, %v626
  %628 = vmatmul.f32.gmra.mxu0 %v368
  %v629 = vpop.f32.mrf.mxu0
  %v630 = vadd.f32 %v574, %v629
  %631 = vmatmul.f32.gmra.mxu0 %v371
  %v632 = vpop.f32.mrf.mxu0
  %v633 = vadd.f32 %v574, %v632
  %634 = vmatmul.f32.gmra.mxu0 %v374
  %v635 = vpop.f32.mrf.mxu0
  %v636 = vadd.f32 %v574, %v635
  %637 = vmatmul.f32.gmra.mxu0 %v377
  %v638 = vpop.f32.mrf.mxu0
  %v639 = vadd.f32 %v574, %v638
  %640 = vmatmul.f32.gmra.mxu0 %v380
  %v641 = vpop.f32.mrf.mxu0
  %v642 = vadd.f32 %v574, %v641
  %643 = vmatmul.f32.gmra.mxu0 %v383
  %v644 = vpop.f32.mrf.mxu0
  %v645 = vadd.f32 %v574, %v644
  %646 = vmatmul.f32.gmra.mxu0 %v386
  %v647 = vpop.f32.mrf.mxu0
  %v648 = vadd.f32 %v574, %v647
  %649 = vmatmul.f32.gmra.mxu0 %v389
  %v650 = vpop.f32.mrf.mxu0
  %v651 = vadd.f32 %v574, %v650
  %652 = vmatmul.f32.gmra.mxu0 %v392
  %v653 = vpop.f32.mrf.mxu0
  %v654 = vadd.f32 %v574, %v653
  %655 = vmatmul.f32.gmra.mxu0 %v395
  %v656 = vpop.f32.mrf.mxu0
  %v657 = vadd.f32 %v574, %v656
  %658 = vmatmul.f32.gmra.mxu0 %v398
  %v659 = vpop.f32.mrf.mxu0
  %v660 = vadd.f32 %v574, %v659
  %661 = vmatmul.f32.gmra.mxu0 %v401
  %v662 = vpop.f32.mrf.mxu0
  %v663 = vadd.f32 %v574, %v662
  %664 = vmatmul.f32.gmra.mxu0 %v404
  %v665 = vpop.f32.mrf.mxu0
  %v666 = vadd.f32 %v574, %v665
  %667 = vmatmul.f32.gmra.mxu0 %v407
  %v668 = vpop.f32.mrf.mxu0
  %v669 = vadd.f32 %v574, %v668
  %670 = vmatmul.f32.gmra.mxu0 %v410
  %v671 = vpop.f32.mrf.mxu0
  %v672 = vadd.f32 %v574, %v671
  %673 = vmatmul.f32.gmra.mxu0 %v413
  %v674 = vpop.f32.mrf.mxu0
  %v675 = vadd.f32 %v574, %v674
  %676 = vmatmul.f32.gmra.mxu0 %v416
  %v677 = vpop.f32.mrf.mxu0
  %v678 = vadd.f32 %v574, %v677
  %679 = vmatmul.f32.gmra.mxu0 %v419
  %v680 = vpop.f32.mrf.mxu0
  %v681 = vadd.f32 %v574, %v680
  %682 = vmatmul.f32.gmra.mxu0 %v422
  %v683 = vpop.f32.mrf.mxu0
  %v684 = vadd.f32 %v574, %v683
  %685 = vmatmul.f32.gmra.mxu0 %v425
  %v686 = vpop.f32.mrf.mxu0
  %v687 = vadd.f32 %v574, %v686
  %688 = vdwg.mxu0
  %689 = vmatpush.msra.mxu0 %v571
  %690 = vmatpush.msra.mxu0 %v570
  %691 = vmatpush.msra.mxu0 %v569
  %692 = vmatpush.msra.mxu0 %v568
  %693 = vmatpush.msra.mxu0 %v567
  %694 = vmatpush.msra.mxu0 %v566
  %695 = vmatpush.msra.mxu0 %v565
  %696 = vmatpush.msra.mxu0 %v564
  %697 = vmatpush.msra.mxu0 %v563
  %698 = vmatpush.msra.mxu0 %v562
  %699 = vmatpush.msra.mxu0 %v561
  %700 = vmatpush.msra.mxu0 %v560
  %701 = vmatpush.msra.mxu0 %v559
  %702 = vmatpush.msra.mxu0 %v558
  %703 = vmatpush.msra.mxu0 %v557
  %704 = vmatpush.msra.mxu0 %v556
  %705 = vmatmul.f32.gmra.mxu0 %v445
  %v706 = vpop.f32.mrf.mxu0
  %v707 = vadd.f32 %v594, %v706
  %708 = vmatmul.f32.gmra.mxu0 %v448
  %v709 = vpop.f32.mrf.mxu0
  %v710 = vadd.f32 %v597, %v709
  %711 = vmatmul.f32.gmra.mxu0 %v451
  %v712 = vpop.f32.mrf.mxu0
  %v713 = vadd.f32 %v600, %v712
  %714 = vmatmul.f32.gmra.mxu0 %v454
  %v715 = vpop.f32.mrf.mxu0
  %v716 = vadd.f32 %v603, %v715
  %717 = vmatmul.f32.gmra.mxu0 %v457
  %v718 = vpop.f32.mrf.mxu0
  %v719 = vadd.f32 %v606, %v718
  %720 = vmatmul.f32.gmra.mxu0 %v460
  %v721 = vpop.f32.mrf.mxu0
  %v722 = vadd.f32 %v609, %v721
  %723 = vmatmul.f32.gmra.mxu0 %v463
  %v724 = vpop.f32.mrf.mxu0
  %v725 = vadd.f32 %v612, %v724
  %726 = vmatmul.f32.gmra.mxu0 %v466
  %v727 = vpop.f32.mrf.mxu0
  %v728 = vadd.f32 %v615, %v727
  %729 = vmatmul.f32.gmra.mxu0 %v469
  %v730 = vpop.f32.mrf.mxu0
  %v731 = vadd.f32 %v618, %v730
  %732 = vmatmul.f32.gmra.mxu0 %v472
  %v733 = vpop.f32.mrf.mxu0
  %v734 = vadd.f32 %v621, %v733
  %735 = vmatmul.f32.gmra.mxu0 %v475
  %v736 = vpop.f32.mrf.mxu0
  %v737 = vadd.f32 %v624, %v736
  %738 = vmatmul.f32.gmra.mxu0 %v478
  %v739 = vpop.f32.mrf.mxu0
  %v740 = vadd.f32 %v627, %v739
  %741 = vmatmul.f32.gmra.mxu0 %v481
  %v742 = vpop.f32.mrf.mxu0
  %v743 = vadd.f32 %v630, %v742
  %744 = vmatmul.f32.gmra.mxu0 %v484
  %v745 = vpop.f32.mrf.mxu0
  %v746 = vadd.f32 %v633, %v745
  %747 = vmatmul.f32.gmra.mxu0 %v487
  %v748 = vpop.f32.mrf.mxu0
  %v749 = vadd.f32 %v636, %v748
  %750 = vmatmul.f32.gmra.mxu0 %v490
  %v751 = vpop.f32.mrf.mxu0
  %v752 = vadd.f32 %v639, %v751
  %753 = vmatmul.f32.gmra.mxu0 %v493
  %v754 = vpop.f32.mrf.mxu0
  %v755 = vadd.f32 %v642, %v754
  %756 = vmatmul.f32.gmra.mxu0 %v496
  %v757 = vpop.f32.mrf.mxu0
  %v758 = vadd.f32 %v645, %v757
  %759 = vmatmul.f32.gmra.mxu0 %v499
  %v760 = vpop.f32.mrf.mxu0
  %v761 = vadd.f32 %v648, %v760
  %762 = vmatmul.f32.gmra.mxu0 %v502
  %v763 = vpop.f32.mrf.mxu0
  %v764 = vadd.f32 %v651, %v763
  %765 = vmatmul.f32.gmra.mxu0 %v505
  %v766 = vpop.f32.mrf.mxu0
  %v767 = vadd.f32 %v654, %v766
  %768 = vmatmul.f32.gmra.mxu0 %v508
  %v769 = vpop.f32.mrf.mxu0
  %v770 = vadd.f32 %v657, %v769
  %771 = vmatmul.f32.gmra.mxu0 %v511
  %v772 = vpop.f32.mrf.mxu0
  %v773 = vadd.f32 %v660, %v772
  %774 = vmatmul.f32.gmra.mxu0 %v514
  %v775 = vpop.f32.mrf.mxu0
  %v776 = vadd.f32 %v663, %v775
  %777 = vmatmul.f32.gmra.mxu0 %v517
  %v778 = vpop.f32.mrf.mxu0
  %v779 = vadd.f32 %v666, %v778
  %780 = vmatmul.f32.gmra.mxu0 %v520
  %v781 = vpop.f32.mrf.mxu0
  %v782 = vadd.f32 %v669, %v781
  %783 = vmatmul.f32.gmra.mxu0 %v523
  %v784 = vpop.f32.mrf.mxu0
  %v785 = vadd.f32 %v672, %v784
  %786 = vmatmul.f32.gmra.mxu0 %v526
  %v787 = vpop.f32.mrf.mxu0
  %v788 = vadd.f32 %v675, %v787
  %789 = vmatmul.f32.gmra.mxu0 %v529
  %v790 = vpop.f32.mrf.mxu0
  %v791 = vadd.f32 %v678, %v790
  %792 = vmatmul.f32.gmra.mxu0 %v532
  %v793 = vpop.f32.mrf.mxu0
  %v794 = vadd.f32 %v681, %v793
  %795 = vmatmul.f32.gmra.mxu0 %v535
  %v796 = vpop.f32.mrf.mxu0
  %v797 = vadd.f32 %v684, %v796
  %798 = vmatmul.f32.gmra.mxu0 %v538
  %v799 = vpop.f32.mrf.mxu0
  %v800 = vadd.f32 %v687, %v799
  %801 = vdwg.mxu0
  %vm802 = vcmask 130048
  %803 = vst.msk [vmem:[%s7] sm:$0xff] %vm802, %v707
  %804 = vst.msk [vmem:[%s7 + $0x8] sm:$0xff] %vm802, %v710
  %805 = vst.msk [vmem:[%s7 + $0x10] sm:$0xff] %vm802, %v713
  %806 = vst.msk [vmem:[%s7 + $0x18] sm:$0xff] %vm802, %v716
  %807 = vst.msk [vmem:[%s7 + $0x20] sm:$0xff] %vm802, %v719
  %808 = vst.msk [vmem:[%s7 + $0x28] sm:$0xff] %vm802, %v722
  %809 = vst.msk [vmem:[%s7 + $0x30] sm:$0xff] %vm802, %v725
  %810 = vst.msk [vmem:[%s7 + $0x38] sm:$0xff] %vm802, %v728
  %811 = vst.msk [vmem:[%s7 + $0x40] sm:$0xff] %vm802, %v731
  %812 = vst.msk [vmem:[%s7 + $0x48] sm:$0xff] %vm802, %v734
  %813 = vst.msk [vmem:[%s7 + $0x50] sm:$0xff] %vm802, %v737
  %814 = vst.msk [vmem:[%s7 + $0x58] sm:$0xff] %vm802, %v740
  %815 = vst.msk [vmem:[%s7 + $0x60] sm:$0xff] %vm802, %v743
  %816 = vst.msk [vmem:[%s7 + $0x68] sm:$0xff] %vm802, %v746
  %817 = vst.msk [vmem:[%s7 + $0x70] sm:$0xff] %vm802, %v749
  %818 = vst.msk [vmem:[%s7 + $0x78] sm:$0xff] %vm802, %v752
  %819 = vst.msk [vmem:[%s7 + $0x80] sm:$0xff] %vm802, %v755
  %820 = vst.msk [vmem:[%s7 + $0x88] sm:$0xff] %vm802, %v758
  %821 = vst.msk [vmem:[%s7 + $0x90] sm:$0xff] %vm802, %v761
  %822 = vst.msk [vmem:[%s7 + $0x98] sm:$0xff] %vm802, %v764
  %823 = vst.msk [vmem:[%s7 + $0xa0] sm:$0xff] %vm802, %v767
  %824 = vst.msk [vmem:[%s7 + $0xa8] sm:$0xff] %vm802, %v770
  %825 = vst.msk [vmem:[%s7 + $0xb0] sm:$0xff] %vm802, %v773
  %826 = vst.msk [vmem:[%s7 + $0xb8] sm:$0xff] %vm802, %v776
  %827 = vst.msk [vmem:[%s7 + $0xc0] sm:$0xff] %vm802, %v779
  %828 = vst.msk [vmem:[%s7 + $0xc8] sm:$0xff] %vm802, %v782
  %829 = vst.msk [vmem:[%s7 + $0xd0] sm:$0xff] %vm802, %v785
  %830 = vst.msk [vmem:[%s7 + $0xd8] sm:$0xff] %vm802, %v788
  %831 = vst.msk [vmem:[%s7 + $0xe0] sm:$0xff] %vm802, %v791
  %832 = vst.msk [vmem:[%s7 + $0xe8] sm:$0xff] %vm802, %v794
  %833 = vst.msk [vmem:[%s7 + $0xf0] sm:$0xff] %vm802, %v797
  %834 = vst.msk [vmem:[%s7 + $0xf8] sm:$0xff] %vm802, %v800
  // Predicated region
  $region30: #{mlp_forward.1} parent=0 // pred_check
    _
  $region31: #{mlp_forward.1} parent=0 // pred_check_branch
    %836 = sbr.rel (0) target = $region33
  $region32: #{mlp_forward.1} parent=0 // pred_region
    _
  $region33: #{mlp_forward.1} parent=0 // pred_fallthru
    _
  // Predicated region
  $region34: #{mlp_forward.1} parent=0 // pred_check
    _
  $region35: #{mlp_forward.1} parent=0 // pred_check_branch
    %838 = sbr.rel (0) target = $region37
  $region36: #{mlp_forward.1} parent=0 // pred_region
    _
  $region37: #{mlp_forward.1} parent=0 // pred_fallthru
    _

</llo_original>
